<compile_context>
chip_gen: v6e
topology: v6e:2x2x1
jax: 0.10.0
libtpu: 0.0.40
codegen_flags: <defaults>
</compile_context>

<pallas_src>
import jax
import jax.numpy as jnp
from jax.experimental import pallas as pl
from jax.experimental.pallas import tpu as pltpu

LANE = 128
SUBLANE = 8


# ------------------------------ small helpers -------------------------------

def _round_up(x, m):
    return ((x + m - 1) // m) * m


def _pad2d(x, rows, cols):
    r, c = x.shape
    if r == rows and c == cols:
        return x
    return jnp.pad(x, ((0, rows - r), (0, cols - c)))


def _pick_row_tile(n_rows, bytes_per_row, target_bytes=2 << 20):
    """Row tile: multiple of 8 sublanes, ~target_bytes of input per tile."""
    tn = max(1, target_bytes // max(bytes_per_row, 1))
    tn = min(tn, n_rows)
    tn = max(SUBLANE, (tn // SUBLANE) * SUBLANE)
    return tn


# ----------------------------- Pallas kernels ------------------------------

def _mlp_l2norm_kernel(x_ref, w1_ref, b1_ref, w2_ref, b2_ref, o_ref):
    # x_ref: (tn, Cp) tile; weights are level-resident (one level per grid l).
    # bf16 MXU operands, f32 accumulation; bias / ReLU / L2-norm in f32.
    x = x_ref[...]
    h = jnp.dot(x.astype(jnp.bfloat16), w1_ref[...].astype(jnp.bfloat16),
                preferred_element_type=jnp.float32) + b1_ref[...]
    h = jnp.maximum(h, 0.0)
    y = jnp.dot(h.astype(jnp.bfloat16), w2_ref[...].astype(jnp.bfloat16),
                preferred_element_type=jnp.float32) + b2_ref[...]
    # Normalize(2): y / (sqrt(sum(y^2, axis=1)) + 1e-7); padded lanes are zero
    # so they do not change the norm.  Divide via EUP approx reciprocal.
    norm = jnp.sqrt(jnp.sum(y * y, axis=1, keepdims=True))
    inv = pl.reciprocal(norm + 1e-7, approx=True)
    o_ref[...] = (y * inv).astype(o_ref.dtype)


def _l2norm_kernel(x_ref, o_ref):
    x = x_ref[...]
    norm = jnp.sqrt(jnp.sum(x * x, axis=1, keepdims=True))
    inv = pl.reciprocal(norm + 1e-7, approx=True)
    o_ref[...] = (x * inv).astype(o_ref.dtype)


# ------------------------------ pallas wrappers ------------------------------

def fused_mlp_l2norm(x, w1, b1, w2, b2, *, tn=None):
    """x: (L, Np, Cp); w1: (L, Cp, NCp); b1/b2: (L, 1, NCp); w2: (L, NCp, NCp).
    Cp, NCp multiples of 128 (lane-dense); Np multiple of tn."""
    L, n, cp = x.shape
    ncp = w1.shape[-1]
    if tn is None:
        tn = _pick_row_tile(n, cp * 4)
    assert n % tn == 0 and cp % LANE == 0 and ncp % LANE == 0
    grid = (L, n // tn)

    tile_bytes = 4 * (tn * cp + cp * ncp + ncp + ncp * ncp + ncp + tn * ncp)
    vmem_limit = int(min(max(2 * tile_bytes + (2 << 20), 8 << 20), 48 << 20))
    flops = 2 * L * n * (cp * ncp + ncp * ncp)
    bytes_accessed = 4 * (x.size + w1.size + b1.size + w2.size + b2.size
                          + L * n * ncp)

    return pl.pallas_call(
        _mlp_l2norm_kernel,
        out_shape=jax.ShapeDtypeStruct((L, n, ncp), x.dtype),
        grid=grid,
        in_specs=[
            pl.BlockSpec((None, tn, cp), lambda l, i: (l, i, 0)),
            pl.BlockSpec((None, cp, ncp), lambda l, i: (l, 0, 0)),
            pl.BlockSpec((None, 1, ncp), lambda l, i: (l, 0, 0)),
            pl.BlockSpec((None, ncp, ncp), lambda l, i: (l, 0, 0)),
            pl.BlockSpec((None, 1, ncp), lambda l, i: (l, 0, 0)),
        ],
        out_specs=pl.BlockSpec((None, tn, ncp), lambda l, i: (l, i, 0)),
        compiler_params=pltpu.CompilerParams(
            dimension_semantics=("parallel", "parallel"),
            vmem_limit_bytes=vmem_limit),
        cost_estimate=pl.CostEstimate(
            flops=flops, transcendentals=2 * L * n,
            bytes_accessed=bytes_accessed),
    )(x, w1, b1, w2, b2)


def fused_l2norm(x, *, tn=None):
    """x: (L, Np, Cp), Cp multiple of 128, Np multiple of tn."""
    L, n, cp = x.shape
    if tn is None:
        tn = _pick_row_tile(n, cp * 4)
    assert n % tn == 0 and cp % LANE == 0
    grid = (L, n // tn)
    tile_bytes = 4 * (2 * tn * cp)
    vmem_limit = int(min(max(2 * tile_bytes + (2 << 20), 8 << 20), 48 << 20))

    return pl.pallas_call(
        _l2norm_kernel,
        out_shape=jax.ShapeDtypeStruct((L, n, cp), x.dtype),
        grid=grid,
        in_specs=[pl.BlockSpec((None, tn, cp), lambda l, i: (l, i, 0))],
        out_specs=pl.BlockSpec((None, tn, cp), lambda l, i: (l, i, 0)),
        compiler_params=pltpu.CompilerParams(
            dimension_semantics=("parallel", "parallel"),
            vmem_limit_bytes=vmem_limit),
        cost_estimate=pl.CostEstimate(
            flops=3 * L * n * cp, transcendentals=2 * L * n,
            bytes_accessed=8 * L * n * cp),
    )(x)


# --------------------------- module-level wrapper ---------------------------

def create_mlp_params(feats, nc, key, init_gain=0.02):
    """Synthetic init matching init_type='normal', gain=0.02:
    weights ~ N(0, init_gain), biases = 0. One MLP per feature level."""
    params = []
    for feat in feats:
        input_nc = feat.shape[1]
        key, k1, k2 = jax.random.split(key, 3)
        w1 = (init_gain * jax.random.normal(k1, (input_nc, nc))).astype(jnp.float32)
        b1 = jnp.zeros((1, nc), jnp.float32)
        w2 = (init_gain * jax.random.normal(k2, (nc, nc))).astype(jnp.float32)
        b2 = jnp.zeros((1, nc), jnp.float32)
        params.append((w1, b1, w2, b2))
    return params


def _run_groups(samples, use_mlp, mlp_params):
    """samples: list of (level_idx, x (N, C)).  Levels with identical padded
    shapes are batched into one lane-dense pallas_call (level axis in grid)."""
    groups = {}
    for idx, x in samples:
        n, c = x.shape
        cp = _round_up(c, LANE)
        if use_mlp:
            ncp = _round_up(mlp_params[idx][0].shape[1], LANE)
            key = (n, cp, ncp)
        else:
            key = (n, cp)
        groups.setdefault(key, []).append((idx, x))

    outs = {}
    for key, members in groups.items():
        n, cp = key[0], key[1]
        tn = _pick_row_tile(n, cp * 4)
        n_pad = _round_up(n, tn)
        xs = jnp.stack([_pad2d(x, n_pad, cp) for _, x in members])   # (L,Np,Cp)
        if use_mlp:
            ncp = key[2]
            w1s = jnp.stack([_pad2d(mlp_params[i][0], cp, ncp) for i, _ in members])
            b1s = jnp.stack([_pad2d(mlp_params[i][1], 1, ncp) for i, _ in members])
            w2s = jnp.stack([_pad2d(mlp_params[i][2], ncp, ncp) for i, _ in members])
            b2s = jnp.stack([_pad2d(mlp_params[i][3], 1, ncp) for i, _ in members])
            y = fused_mlp_l2norm(xs, w1s, b1s, w2s, b2s, tn=tn)
            for j, (i, x) in enumerate(members):
                nc = mlp_params[i][0].shape[1]
                outs[i] = y[j, :x.shape[0], :nc]
        else:
            y = fused_l2norm(xs, tn=tn)
            for j, (i, x) in enumerate(members):
                outs[i] = y[j, :x.shape[0], :x.shape[1]]
    return outs


def patch_sample_f(feats, num_patches=64, patch_ids=None, use_mlp=False,
                   mlp_params=None):
    """Forward pass of PatchSampleF.

    feats: list of NCHW f32 arrays.  Returns (list of sampled/normalized
    features, list of patch-id arrays), matching the PyTorch module semantics.
    """
    return_ids = []
    return_feats = [None] * len(feats)

    if num_patches == 0:
        # TODO(synk): num_patches==0 branch kept in plain JAX (cold path): the
        # original module normalizes over the *spatial* axis (dim 1 of (B,HW,C))
        # and reshapes back to NCHW — reproduced here but not Pallas-accelerated.
        for feat_id, feat in enumerate(feats):
            B, C, H, W = feat.shape
            x = jnp.transpose(feat, (0, 2, 3, 1)).reshape(B, H * W, C)
            if use_mlp:
                w1, b1, w2, b2 = mlp_params[feat_id]
                x = jnp.maximum(x @ w1 + b1, 0.0) @ w2 + b2
            norm = jnp.sqrt(jnp.sum(x * x, axis=1, keepdims=True))
            x = x / (norm + 1e-7)
            return_feats[feat_id] = jnp.transpose(x, (0, 2, 1)).reshape(
                B, x.shape[-1], H, W)
            return_ids.append(jnp.array([], dtype=jnp.int32))
        return return_feats, return_ids

    # Hot path: gather sampled rows (XLA gather; fuses with the pad/stack that
    # feeds the lane-dense kernel input), then one grouped Pallas call.
    samples = []
    for feat_id, feat in enumerate(feats):
        B, C, H, W = feat.shape
        fr = jnp.transpose(feat, (0, 2, 3, 1)).reshape(B, H * W, C)
        if patch_ids is not None:
            pid = patch_ids[feat_id]
        else:
            pid = jax.random.permutation(
                jax.random.PRNGKey(feat_id), H * W)[:min(num_patches, H * W)]
            pid = pid.astype(jnp.int32)
        x = jnp.take(fr, pid, axis=1).reshape(-1, C)    # (B*P, C)
        return_ids.append(pid)
        samples.append((feat_id, x))

    outs = _run_groups(samples, use_mlp, mlp_params)
    for idx, _ in samples:
        return_feats[idx] = outs[idx]
    return return_feats, return_ids


# ------------------------------- reference ----------------------------------

def _ref_forward(feats, patch_ids, use_mlp, mlp_params):
    outs = []
    for feat_id, feat in enumerate(feats):
        B, C, H, W = feat.shape
        fr = jnp.transpose(feat, (0, 2, 3, 1)).reshape(B, H * W, C)
        x = jnp.take(fr, patch_ids[feat_id], axis=1).reshape(-1, C)
        if use_mlp:
            w1, b1, w2, b2 = mlp_params[feat_id]
            x = jnp.maximum(x @ w1 + b1, 0.0) @ w2 + b2
        norm = jnp.sqrt(jnp.sum(x * x, axis=1, keepdims=True))
        outs.append(x / (norm + 1e-7))
    return outs


# --------------------------------- main --------------------------------------

if __name__ == "__main__":
    key = jax.random.PRNGKey(0)
    k_f0, k_f1, k_p0, k_p1, k_mlp = jax.random.split(key, 5)

    B = 2
    nc = 32            # MLP hidden/output width (stand-in for 256)
    num_patches = 64

    # Two feature levels, NCHW like the PyTorch module would receive.
    feats = [
        jax.random.normal(k_f0, (B, 4, 16, 16), jnp.float32),   # H*W = 256
        jax.random.normal(k_f1, (B, 8, 8, 8), jnp.float32),     # H*W = 64
    ]

    # Deterministic patch ids (in PyTorch this is np.random.permutation).
    patch_ids = [
        jax.random.permutation(k_p0, 16 * 16)[:num_patches].astype(jnp.int32),
        jax.random.permutation(k_p1, 8 * 8)[:min(num_patches, 8 * 8)].astype(jnp.int32),
    ]

    mlp_params = create_mlp_params(feats, nc, k_mlp, init_gain=0.02)

    # use_mlp=True path (Linear -> ReLU -> Linear -> L2 norm, fused kernel)
    out_mlp, ids_mlp = patch_sample_f(
        feats, num_patches=num_patches, patch_ids=patch_ids,
        use_mlp=True, mlp_params=mlp_params)
    out_mlp = [jax.block_until_ready(o) for o in out_mlp]

    # use_mlp=False path (sample + L2 norm only)
    out_plain, ids_plain = patch_sample_f(
        feats, num_patches=num_patches, patch_ids=patch_ids, use_mlp=False)
    out_plain = [jax.block_until_ready(o) for o in out_plain]

    # Verify against pure-JAX f32 reference. Tolerances account for bf16 MXU
    # operands (MLP path) and the EUP approximate reciprocal in the normalize.
    ref_mlp = _ref_forward(feats, patch_ids, True, mlp_params)
    ref_plain = _ref_forward(feats, patch_ids, False, None)
    for got, ref in zip(out_mlp, ref_mlp):
        assert got.shape == ref.shape and got.dtype == ref.dtype
        assert jnp.allclose(got, ref, atol=2e-2, rtol=2e-2), \
            float(jnp.max(jnp.abs(got - ref)))
    for got, ref in zip(out_plain, ref_plain):
        assert got.shape == ref.shape and got.dtype == ref.dtype
        assert jnp.allclose(got, ref, atol=1e-2, rtol=1e-2), \
            float(jnp.max(jnp.abs(got - ref)))

    print("KERNEL_OK")
</pallas_src>

<mosaic_0001>
module attributes {stable_mosaic.version = 11 : i64} {
  func.func @_mlp_l2norm_kernel(%arg0: i32, %arg1: i32, %arg2: memref<1x128x128xf32, #tpu.memory_space<vmem>>, %arg3: memref<1x128x128xf32, #tpu.memory_space<vmem>>, %arg4: memref<1x1x128xf32, #tpu.memory_space<vmem>>, %arg5: memref<1x128x128xf32, #tpu.memory_space<vmem>>, %arg6: memref<1x1x128xf32, #tpu.memory_space<vmem>>, %arg7: memref<1x128x128xf32, #tpu.memory_space<vmem>>) attributes {dimension_semantics = [#tpu.dimension_semantics<parallel>, #tpu.dimension_semantics<parallel>], iteration_bounds = array<i64: 2, 1>, scalar_prefetch = 0 : i64, scratch_operands = 0 : i64, tpu.core_type = #tpu.core_type<tc>, window_params = [{transform_indices = @transform_0, window_bounds = array<i64: 1, 128, 128>}, {transform_indices = @transform_1, window_bounds = array<i64: 1, 128, 128>}, {transform_indices = @transform_2, window_bounds = array<i64: 1, 1, 128>}, {transform_indices = @transform_3, window_bounds = array<i64: 1, 128, 128>}, {transform_indices = @transform_4, window_bounds = array<i64: 1, 1, 128>}, {transform_indices = @transform_5, window_bounds = array<i64: 1, 128, 128>}]} {
    %c0 = arith.constant 0 : index
    %c0_0 = arith.constant 0 : index
    %c0_1 = arith.constant 0 : index
    %0 = vector.load %arg2[%c0, %c0_0, %c0_1] : memref<1x128x128xf32, #tpu.memory_space<vmem>>, vector<1x128x128xf32>
    %1 = vector.shape_cast %0 : vector<1x128x128xf32> to vector<128x128xf32>
    %2 = arith.truncf %1 : vector<128x128xf32> to vector<128x128xbf16>
    %c0_2 = arith.constant 0 : index
    %c0_3 = arith.constant 0 : index
    %c0_4 = arith.constant 0 : index
    %3 = vector.load %arg3[%c0_2, %c0_3, %c0_4] : memref<1x128x128xf32, #tpu.memory_space<vmem>>, vector<1x128x128xf32>
    %4 = vector.shape_cast %3 : vector<1x128x128xf32> to vector<128x128xf32>
    %5 = arith.truncf %4 : vector<128x128xf32> to vector<128x128xbf16>
    %cst = arith.constant dense<0.000000e+00> : vector<128x128xf32>
    %6 = tpu.matmul %2, %5, %cst {dimension_numbers = #tpu.dot_dimension_numbers<[1], [0], [0], [1], [0, 0, 1, 1], [], []>} : vector<128x128xbf16>, vector<128x128xbf16>, vector<128x128xf32> -> vector<128x128xf32>
    %c0_5 = arith.constant 0 : index
    %c0_6 = arith.constant 0 : index
    %c0_7 = arith.constant 0 : index
    %7 = vector.load %arg4[%c0_5, %c0_6, %c0_7] : memref<1x1x128xf32, #tpu.memory_space<vmem>>, vector<1x1x128xf32>
    %8 = vector.shape_cast %7 : vector<1x1x128xf32> to vector<1x128xf32>
    %9 = vector.broadcast %8 : vector<1x128xf32> to vector<128x128xf32>
    %10 = arith.addf %6, %9 : vector<128x128xf32>
    %cst_8 = arith.constant 0.000000e+00 : f32
    %11 = vector.broadcast %cst_8 : f32 to vector<128x128xf32>
    %12 = arith.maximumf %10, %11 : vector<128x128xf32>
    %13 = arith.truncf %12 : vector<128x128xf32> to vector<128x128xbf16>
    %c0_9 = arith.constant 0 : index
    %c0_10 = arith.constant 0 : index
    %c0_11 = arith.constant 0 : index
    %14 = vector.load %arg5[%c0_9, %c0_10, %c0_11] : memref<1x128x128xf32, #tpu.memory_space<vmem>>, vector<1x128x128xf32>
    %15 = vector.shape_cast %14 : vector<1x128x128xf32> to vector<128x128xf32>
    %16 = arith.truncf %15 : vector<128x128xf32> to vector<128x128xbf16>
    %cst_12 = arith.constant dense<0.000000e+00> : vector<128x128xf32>
    %17 = tpu.matmul %13, %16, %cst_12 {dimension_numbers = #tpu.dot_dimension_numbers<[1], [0], [0], [1], [0, 0, 1, 1], [], []>} : vector<128x128xbf16>, vector<128x128xbf16>, vector<128x128xf32> -> vector<128x128xf32>
    %c0_13 = arith.constant 0 : index
    %c0_14 = arith.constant 0 : index
    %c0_15 = arith.constant 0 : index
    %18 = vector.load %arg6[%c0_13, %c0_14, %c0_15] : memref<1x1x128xf32, #tpu.memory_space<vmem>>, vector<1x1x128xf32>
    %19 = vector.shape_cast %18 : vector<1x1x128xf32> to vector<1x128xf32>
    %20 = vector.broadcast %19 : vector<1x128xf32> to vector<128x128xf32>
    %21 = arith.addf %17, %20 : vector<128x128xf32>
    %22 = arith.mulf %21, %21 : vector<128x128xf32>
    %cst_16 = arith.constant dense<0.000000e+00> : vector<128xf32>
    %23 = vector.multi_reduction <add>, %22, %cst_16 [1] : vector<128x128xf32> to vector<128xf32>
    %24 = vector.shape_cast %23 : vector<128xf32> to vector<128x1xf32>
    %25 = math.sqrt %24 : vector<128x1xf32>
    %cst_17 = arith.constant 1.000000e-07 : f32
    %26 = vector.broadcast %cst_17 : f32 to vector<128x1xf32>
    %27 = arith.addf %25, %26 : vector<128x1xf32>
    %28 = tpu.reciprocal %27 {approx = true} : vector<128x1xf32> -> vector<128x1xf32>
    %29 = vector.broadcast %28 : vector<128x1xf32> to vector<128x128xf32>
    %30 = arith.mulf %21, %29 : vector<128x128xf32>
    %c0_18 = arith.constant 0 : index
    %c0_19 = arith.constant 0 : index
    %c0_20 = arith.constant 0 : index
    %31 = vector.load %arg7[%c0_18, %c0_19, %c0_20] : memref<1x128x128xf32, #tpu.memory_space<vmem>>, vector<1x128x128xf32>
    %32 = vector.shape_cast %31 : vector<1x128x128xf32> to vector<128x128xf32>
    %33 = vector.shape_cast %30 : vector<128x128xf32> to vector<1x128x128xf32>
    tpu.vector_store %arg7[%c0_18, %c0_19, %c0_20], %33 {strides = array<i32>} : memref<1x128x128xf32, #tpu.memory_space<vmem>>, vector<1x128x128xf32>,
    return
  }
  func.func @transform_0(%arg0: i32, %arg1: i32) -> (i32, i32, i32) {
    %c0_i32 = arith.constant 0 : i32
    %c0_i32_0 = arith.constant 0 : i32
    return %arg0, %arg1, %c0_i32 : i32, i32, i32
  }
  func.func @transform_1(%arg0: i32, %arg1: i32) -> (i32, i32, i32) {
    %c0_i32 = arith.constant 0 : i32
    %c0_i32_0 = arith.constant 0 : i32
    %c0_i32_1 = arith.constant 0 : i32
    return %arg0, %c0_i32, %c0_i32_0 : i32, i32, i32
  }
  func.func @transform_2(%arg0: i32, %arg1: i32) -> (i32, i32, i32) {
    %c0_i32 = arith.constant 0 : i32
    %c0_i32_0 = arith.constant 0 : i32
    %c0_i32_1 = arith.constant 0 : i32
    return %arg0, %c0_i32, %c0_i32_0 : i32, i32, i32
  }
  func.func @transform_3(%arg0: i32, %arg1: i32) -> (i32, i32, i32) {
    %c0_i32 = arith.constant 0 : i32
    %c0_i32_0 = arith.constant 0 : i32
    %c0_i32_1 = arith.constant 0 : i32
    return %arg0, %c0_i32, %c0_i32_0 : i32, i32, i32
  }
  func.func @transform_4(%arg0: i32, %arg1: i32) -> (i32, i32, i32) {
    %c0_i32 = arith.constant 0 : i32
    %c0_i32_0 = arith.constant 0 : i32
    %c0_i32_1 = arith.constant 0 : i32
    return %arg0, %c0_i32, %c0_i32_0 : i32, i32, i32
  }
  func.func @transform_5(%arg0: i32, %arg1: i32) -> (i32, i32, i32) {
    %c0_i32 = arith.constant 0 : i32
    %c0_i32_0 = arith.constant 0 : i32
    return %arg0, %arg1, %c0_i32 : i32, i32, i32
  }
}

</mosaic_0001>

<llo_original>
// kernel: tpu_custom_call.1
$region0: #{tpu_custom_call.1}
  #allocation0 [shape = 'u32[]', space=smem, size = 0x4, offset = 0x4, fixed_abs, tag = 'smem constant byte address 0x4 - core index']
  #allocation1 [shape = 'u32[144,128]{1,0:T(1,128)}', space=vmem, size = 0x12000, scoped, tag = 'internal scratch']
  %s0 = inlined_call_operand.hbm [shape: f32[2,128,128], index: 0, kind: input, shape index: {}]
  %s1 = inlined_call_operand.hbm [shape: f32[2,128,128], index: 1, kind: input, shape index: {}]
  %s2 = inlined_call_operand.vmem [shape: f32[2,1,128], index: 2, kind: input, shape index: {}]
  %s3 = inlined_call_operand.hbm [shape: f32[2,128,128], index: 3, kind: input, shape index: {}]
  %s4 = inlined_call_operand.vmem [shape: f32[2,1,128], index: 4, kind: input, shape index: {}]
  %s5 = inlined_call_operand.hbm [shape: f32[2,128,128], index: 5, kind: output, shape index: {}]
  %s6 = sld [smem:[#allocation0]]
  $region65: #{tpu_custom_call.1} parent=0
    _
  %s8 = ssub.s32 1, %s6
  %s9 = scalar_select 0, %s8, %s6
  $region1: #{tpu_custom_call.1} parent=0
    #allocation2 [shape = 'u8[131072]{0}', space=vmem, size = 0x20000, scoped, tag = 'input window, operand 0']
    #allocation3 [shape = 's32[2]{0}', space=sflag, size = 0x8, scoped, tag = 'scoped memory for tpu_custom_call.1']
    #allocation4 [shape = 's32[2]{0}', space=sflag, size = 0x8, scoped, tag = 'scoped memory for tpu_custom_call.1']
    #allocation5 [shape = 'u8[131072]{0}', space=vmem, size = 0x20000, scoped, tag = 'input window, operand 1']
    #allocation6 [shape = 's32[2]{0}', space=sflag, size = 0x8, scoped, tag = 'scoped memory for tpu_custom_call.1']
    #allocation7 [shape = 'u8[131072]{0}', space=vmem, size = 0x20000, scoped, tag = 'input window, operand 3']
    #allocation8 [shape = 'u8[131072]{0}', space=vmem, size = 0x20000, scoped, tag = 'output window, operand 0']
    %10 = vsyncpa [#allocation3], 0
    %s11 = scalar_lea.sflag [#allocation3], 1
    %12 = vsyncpa %s11, 0
    %13 = vsyncpa [#allocation6], 0
    %s14 = scalar_lea.sflag [#allocation6], 1
    %15 = vsyncpa %s14, 0
    %16 = vsyncpa [#allocation4], 0
    %s17 = scalar_lea.sflag [#allocation4], 1
    %18 = vsyncpa %s17, 0
    loop: start=0, step=1, limit=4
    $region2: #{tpu_custom_call.1} parent=1 // loop_pre_header
      _
    $region3: #{tpu_custom_call.1} parent=1 // loop_header
      %s20 = sphi 0, %s24
      %p21 = scmp.ge.s32.totalorder %s20, 4
      %s27 = sphi 0, %s39
      %s28 = sphi 0, %s35
      %s29 = sphi 0, %s27
      %s30 = sphi 0, %s28
      %s31 = sphi 0, %s29
      %s32 = sphi 0, %s30
      %s44 = sphi 0, %s46
      %s47 = sphi 0, %s44
      %s48 = sphi 0, %s47
      %s64 = sphi 0, %s48
      %s70 = sphi 0, %s72
      %s73 = sphi 0, %s70
      %s74 = sphi 0, %s73
      %s90 = sphi 0, %s74
      %s96 = sphi 0, %s98
      %s99 = sphi 0, %s96
      %s100 = sphi 0, %s99
      %s116 = sphi 0, %s100
      %s122 = sphi 0, %s124
      %s125 = sphi 0, %s122
      %s126 = sphi 0, %s125
      %s142 = sphi 0, %s126
      %s148 = sphi 0, %s150
      %s151 = sphi 0, %s148
      %s152 = sphi 0, %s151
      %s168 = sphi 0, %s152
      %s176 = sphi 0, %s178
      %s179 = sphi 0, %s176
      %s180 = sphi 0, %s179
      %s196 = sphi 0, %s180
    $region4: #{tpu_custom_call.1} parent=1 // loop_header_branch
      %23 = sbr.rel (%p21) target = $region8
    $region5: #{tpu_custom_call.1} parent=1 // loop_body
      %s25 = ssub.s32 %s20, 1
      %s26 = ssub.s32 %s20, 2
      %s33 = sadd.s32 1, %s28
      %p34 = scmp.ge.s32.totalorder %s33, 1
      %s35 = scalar_select %p34, 0, %s33
      %s36 = sadd.s32 1, %s27
      %s37 = scalar_select %p34, %s36, %s27
      %p38 = scmp.ge.s32.totalorder %s37, 2
      %s39 = scalar_select %p38, 0, %s37
      %s40 = ssub.s32 %s27, %s39
      %s41 = ssub.s32 %s28, %s35
      %s42 = sor.u32 %s40, %s41
      %p43 = scmp.eq.s32.totalorder %s42, 0
      %s45 = sadd.s32 %s44, 1
      %s46 = scalar_select %p43, %s44, %s45
      %p49 = pneg %p43
      %p50 = scmp.eq.s32.totalorder %s20, 1
      %p51 = por %p49, %p50
      %p52 = scmp.ne.s32.totalorder %s44, %s47
      %p53 = scmp.eq.s32.totalorder %s20, 0
      %p54 = por %p52, %p53
      %p55 = scmp.ne.s32.totalorder %s44, %s47
      %p56 = scmp.eq.s32.totalorder %s25, 1
      %p57 = por %p55, %p56
      %p58 = scmp.ne.s32.totalorder %s47, %s48
      %p59 = scmp.eq.s32.totalorder %s25, 0
      %p60 = por %p58, %p59
      %p61 = scmp.ne.s32.totalorder %s47, %s48
      %p62 = scmp.eq.s32.totalorder %s26, 1
      %p63 = por %p61, %p62
      %p65 = scmp.ne.s32.totalorder %s48, %s64
      %p66 = scmp.eq.s32.totalorder %s26, 0
      %p67 = por %p65, %p66
      %s68 = ssub.s32 %s27, %s39
      %p69 = scmp.eq.s32.totalorder %s68, 0
      %s71 = sadd.s32 %s70, 1
      %s72 = scalar_select %p69, %s70, %s71
      %p75 = pneg %p69
      %p76 = scmp.eq.s32.totalorder %s20, 1
      %p77 = por %p75, %p76
      %p78 = scmp.ne.s32.totalorder %s70, %s73
      %p79 = scmp.eq.s32.totalorder %s20, 0
      %p80 = por %p78, %p79
      %p81 = scmp.ne.s32.totalorder %s70, %s73
      %p82 = scmp.eq.s32.totalorder %s25, 1
      %p83 = por %p81, %p82
      %p84 = scmp.ne.s32.totalorder %s73, %s74
      %p85 = scmp.eq.s32.totalorder %s25, 0
      %p86 = por %p84, %p85
      %p87 = scmp.ne.s32.totalorder %s73, %s74
      %p88 = scmp.eq.s32.totalorder %s26, 1
      %p89 = por %p87, %p88
      %p91 = scmp.ne.s32.totalorder %s74, %s90
      %p92 = scmp.eq.s32.totalorder %s26, 0
      %p93 = por %p91, %p92
      %s94 = ssub.s32 %s27, %s39
      %p95 = scmp.eq.s32.totalorder %s94, 0
      %s97 = sadd.s32 %s96, 1
      %s98 = scalar_select %p95, %s96, %s97
      %p101 = pneg %p95
      %p102 = scmp.eq.s32.totalorder %s20, 1
      %p103 = por %p101, %p102
      %p104 = scmp.ne.s32.totalorder %s96, %s99
      %p105 = scmp.eq.s32.totalorder %s20, 0
      %p106 = por %p104, %p105
      %p107 = scmp.ne.s32.totalorder %s96, %s99
      %p108 = scmp.eq.s32.totalorder %s25, 1
      %p109 = por %p107, %p108
      %p110 = scmp.ne.s32.totalorder %s99, %s100
      %p111 = scmp.eq.s32.totalorder %s25, 0
      %p112 = por %p110, %p111
      %p113 = scmp.ne.s32.totalorder %s99, %s100
      %p114 = scmp.eq.s32.totalorder %s26, 1
      %p115 = por %p113, %p114
      %p117 = scmp.ne.s32.totalorder %s100, %s116
      %p118 = scmp.eq.s32.totalorder %s26, 0
      %p119 = por %p117, %p118
      %s120 = ssub.s32 %s27, %s39
      %p121 = scmp.eq.s32.totalorder %s120, 0
      %s123 = sadd.s32 %s122, 1
      %s124 = scalar_select %p121, %s122, %s123
      %p127 = pneg %p121
      %p128 = scmp.eq.s32.totalorder %s20, 1
      %p129 = por %p127, %p128
      %p130 = scmp.ne.s32.totalorder %s122, %s125
      %p131 = scmp.eq.s32.totalorder %s20, 0
      %p132 = por %p130, %p131
      %p133 = scmp.ne.s32.totalorder %s122, %s125
      %p134 = scmp.eq.s32.totalorder %s25, 1
      %p135 = por %p133, %p134
      %p136 = scmp.ne.s32.totalorder %s125, %s126
      %p137 = scmp.eq.s32.totalorder %s25, 0
      %p138 = por %p136, %p137
      %p139 = scmp.ne.s32.totalorder %s125, %s126
      %p140 = scmp.eq.s32.totalorder %s26, 1
      %p141 = por %p139, %p140
      %p143 = scmp.ne.s32.totalorder %s126, %s142
      %p144 = scmp.eq.s32.totalorder %s26, 0
      %p145 = por %p143, %p144
      %s146 = ssub.s32 %s27, %s39
      %p147 = scmp.eq.s32.totalorder %s146, 0
      %s149 = sadd.s32 %s148, 1
      %s150 = scalar_select %p147, %s148, %s149
      %p153 = pneg %p147
      %p154 = scmp.eq.s32.totalorder %s20, 1
      %p155 = por %p153, %p154
      %p156 = scmp.ne.s32.totalorder %s148, %s151
      %p157 = scmp.eq.s32.totalorder %s20, 0
      %p158 = por %p156, %p157
      %p159 = scmp.ne.s32.totalorder %s148, %s151
      %p160 = scmp.eq.s32.totalorder %s25, 1
      %p161 = por %p159, %p160
      %p162 = scmp.ne.s32.totalorder %s151, %s152
      %p163 = scmp.eq.s32.totalorder %s25, 0
      %p164 = por %p162, %p163
      %p165 = scmp.ne.s32.totalorder %s151, %s152
      %p166 = scmp.eq.s32.totalorder %s26, 1
      %p167 = por %p165, %p166
      %p169 = scmp.ne.s32.totalorder %s152, %s168
      %p170 = scmp.eq.s32.totalorder %s26, 0
      %p171 = por %p169, %p170
      %s172 = ssub.s32 %s27, %s39
      %s173 = ssub.s32 %s28, %s35
      %s174 = sor.u32 %s172, %s173
      %p175 = scmp.eq.s32.totalorder %s174, 0
      %s177 = sadd.s32 %s176, 1
      %s178 = scalar_select %p175, %s176, %s177
      %p181 = pneg %p175
      %p182 = scmp.eq.s32.totalorder %s20, 1
      %p183 = por %p181, %p182
      %p184 = scmp.ne.s32.totalorder %s176, %s179
      %p185 = scmp.eq.s32.totalorder %s20, 0
      %p186 = por %p184, %p185
      %p187 = scmp.ne.s32.totalorder %s176, %s179
      %p188 = scmp.eq.s32.totalorder %s25, 1
      %p189 = por %p187, %p188
      %p190 = scmp.ne.s32.totalorder %s179, %s180
      %p191 = scmp.eq.s32.totalorder %s25, 0
      %p192 = por %p190, %p191
      %p193 = scmp.ne.s32.totalorder %s179, %s180
      %p194 = scmp.eq.s32.totalorder %s26, 1
      %p195 = por %p193, %p194
      %p197 = scmp.ne.s32.totalorder %s180, %s196
      %p198 = scmp.eq.s32.totalorder %s26, 0
      %p199 = por %p197, %p198
      %p200 = scmp.le.s32.totalorder 1, %s20
      %p201 = scmp.lt.s32.totalorder %s20, 3
      %p202 = pnand %p200, %p201
      %p203 = pneg %p202
      // Predicated region
      $region9: #{tpu_custom_call.1} parent=5 // pred_check
        _
      $region10: #{tpu_custom_call.1} parent=5 // pred_check_branch
        %205 = sbr.rel (%p202) target = $region12
      $region11: #{tpu_custom_call.1} parent=5 // pred_region
        %s206 = ssub.s32 %s20, 1
      $region12: #{tpu_custom_call.1} parent=5 // pred_fallthru
        _
      %p207 = scmp.lt.s32.totalorder %s20, 2
      // Predicated region
      $region13: #{tpu_custom_call.1} parent=5 // pred_check
        %p208 = pneg %p207
      $region14: #{tpu_custom_call.1} parent=5 // pred_check_branch
        %210 = sbr.rel (%p208) target = $region16
      $region15: #{tpu_custom_call.1} parent=5 // pred_region
        // Predicated region
        $region17: #{tpu_custom_call.1} parent=15 // pred_check
          %p211 = pneg %p54
        $region18: #{tpu_custom_call.1} parent=15 // pred_check_branch
          %213 = sbr.rel (%p211) target = $region20
        $region19: #{tpu_custom_call.1} parent=15 // pred_region
          %s214 = sand.u32 %s44, 1
          %s215 = scalar_lea.sflag [#allocation3], %s214
          %s216 = sand.u32 %s44, 1
          %s217 = smul.addr %s216, 128
          %s218 = scalar_lea.vmem [#allocation2], %s217
          %s219 = smul.u32 16, %s28
          %s221 = ssub.s32 2048, 2048
          %222 = vsyncadd %s215, %s221
          %s223 = smul.addr %s27, 16
          %s224 = sadd.s32 %s219, %s223
          %s225 = smul.addr %s224, 128
          %s226 = scalar_lea.hbm %s0, %s225
          %s227 = sshll.u32 %s218, 4
          %s228 = int_to_ptr.vmem [resolvable:$true] %s227
          %233 = dma.hbm_to_vmem [thread:$0]  %s226, 2048, %s228, %s215, 128, 128, 8
        $region20: #{tpu_custom_call.1} parent=15 // pred_fallthru
          _
        // Predicated region
        $region21: #{tpu_custom_call.1} parent=15 // pred_check
          %p234 = pneg %p80
        $region22: #{tpu_custom_call.1} parent=15 // pred_check_branch
          %236 = sbr.rel (%p234) target = $region24
        $region23: #{tpu_custom_call.1} parent=15 // pred_region
          %s237 = sand.u32 %s20, 1
          %s238 = scalar_lea.sflag [#allocation6], %s237
          %s239 = sand.u32 %s70, 1
          %s240 = smul.addr %s239, 128
          %s241 = scalar_lea.vmem [#allocation5], %s240
          %s243 = ssub.s32 2048, 2048
          %244 = vsyncadd %s238, %s243
          %s245 = smul.addr %s27, 16
          %s246 = smul.addr %s245, 128
          %s247 = scalar_lea.hbm %s1, %s246
          %s248 = sshll.u32 %s241, 4
          %s249 = int_to_ptr.vmem [resolvable:$true] %s248
          %254 = dma.hbm_to_vmem [thread:$0]  %s247, 2048, %s249, %s238, 128, 128, 8
        $region24: #{tpu_custom_call.1} parent=15 // pred_fallthru
          _
        // Predicated region
        $region25: #{tpu_custom_call.1} parent=15 // pred_check
          %p255 = pneg %p106
        $region26: #{tpu_custom_call.1} parent=15 // pred_check_branch
          %257 = sbr.rel (%p255) target = $region28
        $region27: #{tpu_custom_call.1} parent=15 // pred_region
          %p258 = scmp.lt.s32.totalorder %s27, 1
          %s259 = scalar_select %p258, %s27, 1
          %s260 = scalar_lea.vmem %s2, %s259
        $region28: #{tpu_custom_call.1} parent=15 // pred_fallthru
          _
        // Predicated region
        $region29: #{tpu_custom_call.1} parent=15 // pred_check
          %p261 = pneg %p132
        $region30: #{tpu_custom_call.1} parent=15 // pred_check_branch
          %263 = sbr.rel (%p261) target = $region32
        $region31: #{tpu_custom_call.1} parent=15 // pred_region
          %s264 = sand.u32 %s20, 1
          %s265 = scalar_lea.sflag [#allocation6], %s264
          %s266 = sand.u32 %s122, 1
          %s267 = smul.addr %s266, 128
          %s268 = scalar_lea.vmem [#allocation7], %s267
          %s270 = ssub.s32 2048, 2048
          %271 = vsyncadd %s265, %s270
          %s272 = smul.addr %s27, 16
          %s273 = smul.addr %s272, 128
          %s274 = scalar_lea.hbm %s3, %s273
          %s275 = sshll.u32 %s268, 4
          %s276 = int_to_ptr.vmem [resolvable:$true] %s275
          %281 = dma.hbm_to_vmem [thread:$0]  %s274, 2048, %s276, %s265, 128, 128, 8
        $region32: #{tpu_custom_call.1} parent=15 // pred_fallthru
          _
        // Predicated region
        $region33: #{tpu_custom_call.1} parent=15 // pred_check
          %p282 = pneg %p158
        $region34: #{tpu_custom_call.1} parent=15 // pred_check_branch
          %284 = sbr.rel (%p282) target = $region36
        $region35: #{tpu_custom_call.1} parent=15 // pred_region
          %p285 = scmp.lt.s32.totalorder %s27, 1
          %s286 = scalar_select %p285, %s27, 1
          %s287 = scalar_lea.vmem %s4, %s286
        $region36: #{tpu_custom_call.1} parent=15 // pred_fallthru
          _
      $region16: #{tpu_custom_call.1} parent=5 // pred_fallthru
        _
      %p288 = scmp.le.s32.totalorder 1, %s20
      %p289 = scmp.lt.s32.totalorder %s20, 3
      %p290 = pnand %p288, %p289
      %p291 = pneg %p290
      // Predicated region
      $region37: #{tpu_custom_call.1} parent=5 // pred_check
        _
      $region38: #{tpu_custom_call.1} parent=5 // pred_check_branch
        %293 = sbr.rel (%p290) target = $region40
      $region39: #{tpu_custom_call.1} parent=5 // pred_region
        %s294 = ssub.s32 %s20, 1
        %s295 = sand.u32 %s47, 1
        %s296 = scalar_lea.sflag [#allocation3], %s295
        %s297 = sand.u32 %s47, 1
        %s298 = smul.addr %s297, 128
        %s299 = scalar_lea.vmem [#allocation2], %s298
        // Predicated region
        $region41: #{tpu_custom_call.1} parent=39 // pred_check
          %p300 = pneg %p60
        $region42: #{tpu_custom_call.1} parent=39 // pred_check_branch
          %302 = sbr.rel (%p300) target = $region44
        $region43: #{tpu_custom_call.1} parent=39 // pred_region
          %303 = dma.done %s296, 2048
        $region44: #{tpu_custom_call.1} parent=39 // pred_fallthru
          _
        %s304 = sand.u32 %s25, 1
        %s305 = scalar_lea.sflag [#allocation6], %s304
        %s306 = sand.u32 %s73, 1
        %s307 = smul.addr %s306, 128
        %s308 = scalar_lea.vmem [#allocation5], %s307
        // Predicated region
        $region45: #{tpu_custom_call.1} parent=39 // pred_check
          %p309 = pneg %p86
        $region46: #{tpu_custom_call.1} parent=39 // pred_check_branch
          %311 = sbr.rel (%p309) target = $region48
        $region47: #{tpu_custom_call.1} parent=39 // pred_region
          %312 = dma.done %s305, 2048
        $region48: #{tpu_custom_call.1} parent=39 // pred_fallthru
          _
        %s313 = sand.u32 %s25, 1
        %s314 = scalar_lea.sflag [#allocation6], %s313
        %s315 = sand.u32 %s125, 1
        %s316 = smul.addr %s315, 128
        %s317 = scalar_lea.vmem [#allocation7], %s316
        // Predicated region
        $region49: #{tpu_custom_call.1} parent=39 // pred_check
          %p318 = pneg %p138
        $region50: #{tpu_custom_call.1} parent=39 // pred_check_branch
          %320 = sbr.rel (%p318) target = $region52
        $region51: #{tpu_custom_call.1} parent=39 // pred_region
          %321 = dma.done %s314, 2048
        $region52: #{tpu_custom_call.1} parent=39 // pred_fallthru
          _
        %s322 = sand.u32 %s47, 1
        %s323 = scalar_lea.sflag [#allocation3], %s322
        %s324 = sand.u32 %s47, 1
        %s325 = smul.addr %s324, 128
        %s326 = scalar_lea.vmem [#allocation2], %s325
        %p327 = pneg %p60
        %p328 = pneg %p57
        %s329 = sand.u32 %s25, 1
        %s330 = scalar_lea.sflag [#allocation6], %s329
        %s331 = sand.u32 %s73, 1
        %s332 = smul.addr %s331, 128
        %s333 = scalar_lea.vmem [#allocation5], %s332
        %p334 = pneg %p86
        %p335 = pneg %p83
        %p336 = scmp.lt.s32.totalorder %s29, 1
        %s337 = scalar_select %p336, %s29, 1
        %s338 = scalar_lea.vmem %s2, %s337
        %p339 = pneg %p112
        %p340 = pneg %p109
        %s341 = sand.u32 %s25, 1
        %s342 = scalar_lea.sflag [#allocation6], %s341
        %s343 = sand.u32 %s125, 1
        %s344 = smul.addr %s343, 128
        %s345 = scalar_lea.vmem [#allocation7], %s344
        %p346 = pneg %p138
        %p347 = pneg %p135
        %p348 = scmp.lt.s32.totalorder %s29, 1
        %s349 = scalar_select %p348, %s29, 1
        %s350 = scalar_lea.vmem %s4, %s349
        %p351 = pneg %p164
        %p352 = pneg %p161
        %p353 = pneg %p192
        %p354 = pneg %p189
        %s355 = sand.u32 %s179, 1
        %s356 = scalar_lea.sflag [#allocation4], %s355
        %s357 = sand.u32 %s179, 1
        %s358 = smul.addr %s357, 128
        %s359 = scalar_lea.vmem [#allocation8], %s358
        %s360 = smul.u32 16, %s30
        %p361 = scmp.lt.s32.totalorder %s29, 1
        %s362 = scalar_select %p361, %s29, 1
        %s363 = scalar_lea.vmem %s2, %s362
        %p364 = scmp.lt.s32.totalorder %s29, 1
        %s365 = scalar_select %p364, %s29, 1
        %s366 = scalar_lea.vmem %s4, %s365
        %s367 = smul.u32 16, %s30
        %v369 = vld [vmem:[%s299] sm:$0xff]
        %v370 = vld [vmem:[%s299 + $0x8] sm:$0xff]
        %v371 = vld [vmem:[%s299 + $0x10] sm:$0xff]
        %v372 = vld [vmem:[%s299 + $0x18] sm:$0xff]
        %v373 = vld [vmem:[%s299 + $0x20] sm:$0xff]
        %v374 = vld [vmem:[%s299 + $0x28] sm:$0xff]
        %v375 = vld [vmem:[%s299 + $0x30] sm:$0xff]
        %v376 = vld [vmem:[%s299 + $0x38] sm:$0xff]
        %v377 = vld [vmem:[%s299 + $0x40] sm:$0xff]
        %v378 = vld [vmem:[%s299 + $0x48] sm:$0xff]
        %v379 = vld [vmem:[%s299 + $0x50] sm:$0xff]
        %v380 = vld [vmem:[%s299 + $0x58] sm:$0xff]
        %v381 = vld [vmem:[%s299 + $0x60] sm:$0xff]
        %v382 = vld [vmem:[%s299 + $0x68] sm:$0xff]
        %v383 = vld [vmem:[%s299 + $0x70] sm:$0xff]
        %v384 = vld [vmem:[%s299 + $0x78] sm:$0xff]
        %v385 = vpack.c.bf16 %v370, %v369
        %v386 = vpack.c.bf16 %v372, %v371
        %v387 = vpack.c.bf16 %v374, %v373
        %v388 = vpack.c.bf16 %v376, %v375
        %v389 = vpack.c.bf16 %v378, %v377
        %v390 = vpack.c.bf16 %v380, %v379
        %v391 = vpack.c.bf16 %v382, %v381
        %v392 = vpack.c.bf16 %v384, %v383
        %v393 = vld [vmem:[%s308] sm:$0xff]
        %v394 = vld [vmem:[%s308 + $0x8] sm:$0xff]
        %v395 = vld [vmem:[%s308 + $0x10] sm:$0xff]
        %v396 = vld [vmem:[%s308 + $0x18] sm:$0xff]
        %v397 = vld [vmem:[%s308 + $0x20] sm:$0xff]
        %v398 = vld [vmem:[%s308 + $0x28] sm:$0xff]
        %v399 = vld [vmem:[%s308 + $0x30] sm:$0xff]
        %v400 = vld [vmem:[%s308 + $0x38] sm:$0xff]
        %v401 = vld [vmem:[%s308 + $0x40] sm:$0xff]
        %v402 = vld [vmem:[%s308 + $0x48] sm:$0xff]
        %v403 = vld [vmem:[%s308 + $0x50] sm:$0xff]
        %v404 = vld [vmem:[%s308 + $0x58] sm:$0xff]
        %v405 = vld [vmem:[%s308 + $0x60] sm:$0xff]
        %v406 = vld [vmem:[%s308 + $0x68] sm:$0xff]
        %v407 = vld [vmem:[%s308 + $0x70] sm:$0xff]
        %v408 = vld [vmem:[%s308 + $0x78] sm:$0xff]
        %v409 = vpack.c.bf16 %v394, %v393
        %v410 = vpack.c.bf16 %v396, %v395
        %v411 = vpack.c.bf16 %v398, %v397
        %v412 = vpack.c.bf16 %v400, %v399
        %v413 = vpack.c.bf16 %v402, %v401
        %v414 = vpack.c.bf16 %v404, %v403
        %v415 = vpack.c.bf16 %v406, %v405
        %v416 = vpack.c.bf16 %v408, %v407
        %v417 = vld [vmem:[%s363] sm:$0x1]
        %v419 = vlaneseq
        %v420 = vshrl.u32 %v419, 7
        %v421 = vsub.s32 0, %v420
        %v422 = vrot.slane %v417, %v421
        %424 = vmatprep.subr.bf16.mxu0 0
        %425 = vmatpush1.bf16.msra.mxu0 %v416
        %426 = vmatprep.subr.bf16.mxu0 0
        %427 = vmatpush1.bf16.msra.mxu0 %v415
        %428 = vmatprep.subr.bf16.mxu0 0
        %429 = vmatpush1.bf16.msra.mxu0 %v414
        %430 = vmatprep.subr.bf16.mxu0 0
        %431 = vmatpush1.bf16.msra.mxu0 %v413
        %432 = vmatprep.subr.bf16.mxu0 0
        %433 = vmatpush1.bf16.msra.mxu0 %v412
        %434 = vmatprep.subr.bf16.mxu0 0
        %435 = vmatpush1.bf16.msra.mxu0 %v411
        %436 = vmatprep.subr.bf16.mxu0 0
        %437 = vmatpush1.bf16.msra.mxu0 %v410
        %438 = vmatprep.subr.bf16.mxu0 0
        %439 = vmatpush1.bf16.msra.mxu0 %v409
        %440 = vmatprep.subr.bf16.mxu0 0
        %441 = vmatpush2.bf16.msra.mxu0 0
        %442 = vmatprep.subr.bf16.mxu0 0
        %443 = vmatpush2.bf16.msra.mxu0 0
        %444 = vmatprep.subr.bf16.mxu0 0
        %445 = vmatpush2.bf16.msra.mxu0 0
        %446 = vmatprep.subr.bf16.mxu0 0
        %447 = vmatpush2.bf16.msra.mxu0 0
        %448 = vmatprep.subr.bf16.mxu0 0
        %449 = vmatpush2.bf16.msra.mxu0 0
        %450 = vmatprep.subr.bf16.mxu0 0
        %451 = vmatpush2.bf16.msra.mxu0 0
        %452 = vmatprep.subr.bf16.mxu0 0
        %453 = vmatpush2.bf16.msra.mxu0 0
        %454 = vmatprep.subr.bf16.mxu0 0
        %455 = vmatpush2.bf16.msra.mxu0 0
        %456 = vmatprep.mubr.bf16.mxu0 0
        %457 = vmatmul.mubr.bf16.gmra.mxu0 %v385
        %v458 = vpop.f32.mrf.mxu0
        %v459 = vadd.f32 %v422, %v458
        %v460 = vpop.f32.mrf.mxu0
        %v461 = vpop.f32.mrf.mxu0
        %v462 = vadd.f32 %v422, %v461
        %v463 = vpop.f32.mrf.mxu0
        %464 = vmatprep.mubr.bf16.mxu0 0
        %465 = vmatmul.mubr.bf16.gmra.mxu0 %v386
        %v466 = vpop.f32.mrf.mxu0
        %v467 = vadd.f32 %v422, %v466
        %v468 = vpop.f32.mrf.mxu0
        %v469 = vpop.f32.mrf.mxu0
        %v470 = vadd.f32 %v422, %v469
        %v471 = vpop.f32.mrf.mxu0
        %472 = vmatprep.mubr.bf16.mxu0 0
        %473 = vmatmul.mubr.bf16.gmra.mxu0 %v387
        %v474 = vpop.f32.mrf.mxu0
        %v475 = vadd.f32 %v422, %v474
        %v476 = vpop.f32.mrf.mxu0
        %v477 = vpop.f32.mrf.mxu0
        %v478 = vadd.f32 %v422, %v477
        %v479 = vpop.f32.mrf.mxu0
        %480 = vmatprep.mubr.bf16.mxu0 0
        %481 = vmatmul.mubr.bf16.gmra.mxu0 %v388
        %v482 = vpop.f32.mrf.mxu0
        %v483 = vadd.f32 %v422, %v482
        %v484 = vpop.f32.mrf.mxu0
        %v485 = vpop.f32.mrf.mxu0
        %v486 = vadd.f32 %v422, %v485
        %v487 = vpop.f32.mrf.mxu0
        %488 = vmatprep.mubr.bf16.mxu0 0
        %489 = vmatmul.mubr.bf16.gmra.mxu0 %v389
        %v490 = vpop.f32.mrf.mxu0
        %v491 = vadd.f32 %v422, %v490
        %v492 = vpop.f32.mrf.mxu0
        %v493 = vpop.f32.mrf.mxu0
        %v494 = vadd.f32 %v422, %v493
        %v495 = vpop.f32.mrf.mxu0
        %496 = vmatprep.mubr.bf16.mxu0 0
        %497 = vmatmul.mubr.bf16.gmra.mxu0 %v390
        %v498 = vpop.f32.mrf.mxu0
        %v499 = vadd.f32 %v422, %v498
        %v500 = vpop.f32.mrf.mxu0
        %v501 = vpop.f32.mrf.mxu0
        %v502 = vadd.f32 %v422, %v501
        %v503 = vpop.f32.mrf.mxu0
        %504 = vmatprep.mubr.bf16.mxu0 0
        %505 = vmatmul.mubr.bf16.gmra.mxu0 %v391
        %v506 = vpop.f32.mrf.mxu0
        %v507 = vadd.f32 %v422, %v506
        %v508 = vpop.f32.mrf.mxu0
        %v509 = vpop.f32.mrf.mxu0
        %v510 = vadd.f32 %v422, %v509
        %v511 = vpop.f32.mrf.mxu0
        %512 = vmatprep.mubr.bf16.mxu0 0
        %513 = vmatmul.mubr.bf16.gmra.mxu0 %v392
        %v514 = vpop.f32.mrf.mxu0
        %v515 = vadd.f32 %v422, %v514
        %v516 = vpop.f32.mrf.mxu0
        %v517 = vpop.f32.mrf.mxu0
        %v518 = vadd.f32 %v422, %v517
        %v519 = vpop.f32.mrf.mxu0
        %520 = vdwg.mxu0
        %v521 = vmax.f32 %v459, 0.0
        %v522 = vmax.f32 %v462, 0.0
        %v523 = vmax.f32 %v467, 0.0
        %v524 = vmax.f32 %v470, 0.0
        %v525 = vmax.f32 %v475, 0.0
        %v526 = vmax.f32 %v478, 0.0
        %v527 = vmax.f32 %v483, 0.0
        %v528 = vmax.f32 %v486, 0.0
        %v529 = vmax.f32 %v491, 0.0
        %v530 = vmax.f32 %v494, 0.0
        %v531 = vmax.f32 %v499, 0.0
        %v532 = vmax.f32 %v502, 0.0
        %v533 = vmax.f32 %v507, 0.0
        %v534 = vmax.f32 %v510, 0.0
        %v535 = vmax.f32 %v515, 0.0
        %v536 = vmax.f32 %v518, 0.0
        %v537 = vpack.c.bf16 %v522, %v521
        %v538 = vpack.c.bf16 %v524, %v523
        %v539 = vpack.c.bf16 %v526, %v525
        %v540 = vpack.c.bf16 %v528, %v527
        %v541 = vpack.c.bf16 %v530, %v529
        %v542 = vpack.c.bf16 %v532, %v531
        %v543 = vpack.c.bf16 %v534, %v533
        %v544 = vpack.c.bf16 %v536, %v535
        %v545 = vld [vmem:[%s317] sm:$0xff]
        %v546 = vld [vmem:[%s317 + $0x8] sm:$0xff]
        %v547 = vld [vmem:[%s317 + $0x10] sm:$0xff]
        %v548 = vld [vmem:[%s317 + $0x18] sm:$0xff]
        %v549 = vld [vmem:[%s317 + $0x20] sm:$0xff]
        %v550 = vld [vmem:[%s317 + $0x28] sm:$0xff]
        %v551 = vld [vmem:[%s317 + $0x30] sm:$0xff]
        %v552 = vld [vmem:[%s317 + $0x38] sm:$0xff]
        %v553 = vld [vmem:[%s317 + $0x40] sm:$0xff]
        %v554 = vld [vmem:[%s317 + $0x48] sm:$0xff]
        %v555 = vld [vmem:[%s317 + $0x50] sm:$0xff]
        %v556 = vld [vmem:[%s317 + $0x58] sm:$0xff]
        %v557 = vld [vmem:[%s317 + $0x60] sm:$0xff]
        %v558 = vld [vmem:[%s317 + $0x68] sm:$0xff]
        %v559 = vld [vmem:[%s317 + $0x70] sm:$0xff]
        %v560 = vld [vmem:[%s317 + $0x78] sm:$0xff]
        %v561 = vpack.c.bf16 %v546, %v545
        %v562 = vpack.c.bf16 %v548, %v547
        %v563 = vpack.c.bf16 %v550, %v549
        %v564 = vpack.c.bf16 %v552, %v551
        %v565 = vpack.c.bf16 %v554, %v553
        %v566 = vpack.c.bf16 %v556, %v555
        %v567 = vpack.c.bf16 %v558, %v557
        %v568 = vpack.c.bf16 %v560, %v559
        %v569 = vld [vmem:[%s366] sm:$0x1]
        %v571 = vlaneseq
        %v572 = vshrl.u32 %v571, 7
        %v573 = vsub.s32 0, %v572
        %v574 = vrot.slane %v569, %v573
        %576 = vmatprep.subr.bf16.mxu0 0
        %577 = vmatpush1.bf16.msra.mxu0 %v568
        %578 = vmatprep.subr.bf16.mxu0 0
        %579 = vmatpush1.bf16.msra.mxu0 %v567
        %580 = vmatprep.subr.bf16.mxu0 0
        %581 = vmatpush1.bf16.msra.mxu0 %v566
        %582 = vmatprep.subr.bf16.mxu0 0
        %583 = vmatpush1.bf16.msra.mxu0 %v565
        %584 = vmatprep.subr.bf16.mxu0 0
        %585 = vmatpush1.bf16.msra.mxu0 %v564
        %586 = vmatprep.subr.bf16.mxu0 0
        %587 = vmatpush1.bf16.msra.mxu0 %v563
        %588 = vmatprep.subr.bf16.mxu0 0
        %589 = vmatpush1.bf16.msra.mxu0 %v562
        %590 = vmatprep.subr.bf16.mxu0 0
        %591 = vmatpush1.bf16.msra.mxu0 %v561
        %592 = vmatprep.subr.bf16.mxu0 0
        %593 = vmatpush2.bf16.msra.mxu0 0
        %594 = vmatprep.subr.bf16.mxu0 0
        %595 = vmatpush2.bf16.msra.mxu0 0
        %596 = vmatprep.subr.bf16.mxu0 0
        %597 = vmatpush2.bf16.msra.mxu0 0
        %598 = vmatprep.subr.bf16.mxu0 0
        %599 = vmatpush2.bf16.msra.mxu0 0
        %600 = vmatprep.subr.bf16.mxu0 0
        %601 = vmatpush2.bf16.msra.mxu0 0
        %602 = vmatprep.subr.bf16.mxu0 0
        %603 = vmatpush2.bf16.msra.mxu0 0
        %604 = vmatprep.subr.bf16.mxu0 0
        %605 = vmatpush2.bf16.msra.mxu0 0
        %606 = vmatprep.subr.bf16.mxu0 0
        %607 = vmatpush2.bf16.msra.mxu0 0
        %608 = vmatprep.mubr.bf16.mxu0 0
        %609 = vmatmul.mubr.bf16.gmra.mxu0 %v537
        %v610 = vpop.f32.mrf.mxu0
        %v611 = vadd.f32 %v574, %v610
        %v612 = vpop.f32.mrf.mxu0
        %v613 = vpop.f32.mrf.mxu0
        %v614 = vadd.f32 %v574, %v613
        %v615 = vpop.f32.mrf.mxu0
        %616 = vmatprep.mubr.bf16.mxu0 0
        %617 = vmatmul.mubr.bf16.gmra.mxu0 %v538
        %v618 = vpop.f32.mrf.mxu0
        %v619 = vadd.f32 %v574, %v618
        %v620 = vpop.f32.mrf.mxu0
        %v621 = vpop.f32.mrf.mxu0
        %v622 = vadd.f32 %v574, %v621
        %v623 = vpop.f32.mrf.mxu0
        %624 = vmatprep.mubr.bf16.mxu0 0
        %625 = vmatmul.mubr.bf16.gmra.mxu0 %v539
        %v626 = vpop.f32.mrf.mxu0
        %v627 = vadd.f32 %v574, %v626
        %v628 = vpop.f32.mrf.mxu0
        %v629 = vpop.f32.mrf.mxu0
        %v630 = vadd.f32 %v574, %v629
        %v631 = vpop.f32.mrf.mxu0
        %632 = vmatprep.mubr.bf16.mxu0 0
        %633 = vmatmul.mubr.bf16.gmra.mxu0 %v540
        %v634 = vpop.f32.mrf.mxu0
        %v635 = vadd.f32 %v574, %v634
        %v636 = vpop.f32.mrf.mxu0
        %v637 = vpop.f32.mrf.mxu0
        %v638 = vadd.f32 %v574, %v637
        %v639 = vpop.f32.mrf.mxu0
        %640 = vmatprep.mubr.bf16.mxu0 0
        %641 = vmatmul.mubr.bf16.gmra.mxu0 %v541
        %v642 = vpop.f32.mrf.mxu0
        %v643 = vadd.f32 %v574, %v642
        %v644 = vpop.f32.mrf.mxu0
        %v645 = vpop.f32.mrf.mxu0
        %v646 = vadd.f32 %v574, %v645
        %v647 = vpop.f32.mrf.mxu0
        %648 = vmatprep.mubr.bf16.mxu0 0
        %649 = vmatmul.mubr.bf16.gmra.mxu0 %v542
        %v650 = vpop.f32.mrf.mxu0
        %v651 = vadd.f32 %v574, %v650
        %v652 = vpop.f32.mrf.mxu0
        %v653 = vpop.f32.mrf.mxu0
        %v654 = vadd.f32 %v574, %v653
        %v655 = vpop.f32.mrf.mxu0
        %656 = vmatprep.mubr.bf16.mxu0 0
        %657 = vmatmul.mubr.bf16.gmra.mxu0 %v543
        %v658 = vpop.f32.mrf.mxu0
        %v659 = vadd.f32 %v574, %v658
        %v660 = vpop.f32.mrf.mxu0
        %v661 = vpop.f32.mrf.mxu0
        %v662 = vadd.f32 %v574, %v661
        %v663 = vpop.f32.mrf.mxu0
        %664 = vmatprep.mubr.bf16.mxu0 0
        %665 = vmatmul.mubr.bf16.gmra.mxu0 %v544
        %v666 = vpop.f32.mrf.mxu0
        %v667 = vadd.f32 %v574, %v666
        %v668 = vpop.f32.mrf.mxu0
        %v669 = vpop.f32.mrf.mxu0
        %v670 = vadd.f32 %v574, %v669
        %v671 = vpop.f32.mrf.mxu0
        %672 = vdwg.mxu0
        %v673 = vmul.f32 %v611, %v611
        %v674 = vmul.f32 %v614, %v614
        %v675 = vmul.f32 %v619, %v619
        %v676 = vmul.f32 %v622, %v622
        %v677 = vmul.f32 %v627, %v627
        %v678 = vmul.f32 %v630, %v630
        %v679 = vmul.f32 %v635, %v635
        %v680 = vmul.f32 %v638, %v638
        %v681 = vmul.f32 %v643, %v643
        %v682 = vmul.f32 %v646, %v646
        %v683 = vmul.f32 %v651, %v651
        %v684 = vmul.f32 %v654, %v654
        %v685 = vmul.f32 %v659, %v659
        %v686 = vmul.f32 %v662, %v662
        %v687 = vmul.f32 %v667, %v667
        %v688 = vmul.f32 %v670, %v670
        %689 = vadd.xlane.f32.xlu0 %v673
        %v690 = vpop.xlane.xlu0 %689
        %691 = vadd.xlane.f32.xlu0 %v674
        %v692 = vpop.xlane.xlu0 %691
        %693 = vadd.xlane.f32.xlu0 %v675
        %v694 = vpop.xlane.xlu0 %693
        %695 = vadd.xlane.f32.xlu0 %v676
        %v696 = vpop.xlane.xlu0 %695
        %697 = vadd.xlane.f32.xlu0 %v677
        %v698 = vpop.xlane.xlu0 %697
        %699 = vadd.xlane.f32.xlu0 %v678
        %v700 = vpop.xlane.xlu0 %699
        %701 = vadd.xlane.f32.xlu0 %v679
        %v702 = vpop.xlane.xlu0 %701
        %703 = vadd.xlane.f32.xlu0 %v680
        %v704 = vpop.xlane.xlu0 %703
        %705 = vadd.xlane.f32.xlu0 %v681
        %v706 = vpop.xlane.xlu0 %705
        %707 = vadd.xlane.f32.xlu0 %v682
        %v708 = vpop.xlane.xlu0 %707
        %709 = vadd.xlane.f32.xlu0 %v683
        %v710 = vpop.xlane.xlu0 %709
        %711 = vadd.xlane.f32.xlu0 %v684
        %v712 = vpop.xlane.xlu0 %711
        %713 = vadd.xlane.f32.xlu0 %v685
        %v714 = vpop.xlane.xlu0 %713
        %715 = vadd.xlane.f32.xlu0 %v686
        %v716 = vpop.xlane.xlu0 %715
        %717 = vadd.xlane.f32.xlu0 %v687
        %v718 = vpop.xlane.xlu0 %717
        %719 = vadd.xlane.f32.xlu0 %v688
        %v720 = vpop.xlane.xlu0 %719
        %v721 = vrsqrt.pop %v690
        %v722 = vmul.f32 %v690, %v721
        %vm723 = vcmp.eq.f32.partialorder %v690, inf
        %v724 = vsel %vm723, %v690, %v722
        %vm725 = vcmp.eq.f32.partialorder %v690, 0.0
        %v726 = vand.u32 %v690, 2147483648
        %v727 = vsel %vm725, %v726, %v724
        %v728 = vrsqrt.pop %v692
        %v729 = vmul.f32 %v692, %v728
        %vm730 = vcmp.eq.f32.partialorder %v692, inf
        %v731 = vsel %vm730, %v692, %v729
        %vm732 = vcmp.eq.f32.partialorder %v692, 0.0
        %v733 = vand.u32 %v692, 2147483648
        %v734 = vsel %vm732, %v733, %v731
        %v735 = vrsqrt.pop %v694
        %v736 = vmul.f32 %v694, %v735
        %vm737 = vcmp.eq.f32.partialorder %v694, inf
        %v738 = vsel %vm737, %v694, %v736
        %vm739 = vcmp.eq.f32.partialorder %v694, 0.0
        %v740 = vand.u32 %v694, 2147483648
        %v741 = vsel %vm739, %v740, %v738
        %v742 = vrsqrt.pop %v696
        %v743 = vmul.f32 %v696, %v742
        %vm744 = vcmp.eq.f32.partialorder %v696, inf
        %v745 = vsel %vm744, %v696, %v743
        %vm746 = vcmp.eq.f32.partialorder %v696, 0.0
        %v747 = vand.u32 %v696, 2147483648
        %v748 = vsel %vm746, %v747, %v745
        %v749 = vrsqrt.pop %v698
        %v750 = vmul.f32 %v698, %v749
        %vm751 = vcmp.eq.f32.partialorder %v698, inf
        %v752 = vsel %vm751, %v698, %v750
        %vm753 = vcmp.eq.f32.partialorder %v698, 0.0
        %v754 = vand.u32 %v698, 2147483648
        %v755 = vsel %vm753, %v754, %v752
        %v756 = vrsqrt.pop %v700
        %v757 = vmul.f32 %v700, %v756
        %vm758 = vcmp.eq.f32.partialorder %v700, inf
        %v759 = vsel %vm758, %v700, %v757
        %vm760 = vcmp.eq.f32.partialorder %v700, 0.0
        %v761 = vand.u32 %v700, 2147483648
        %v762 = vsel %vm760, %v761, %v759
        %v763 = vrsqrt.pop %v702
        %v764 = vmul.f32 %v702, %v763
        %vm765 = vcmp.eq.f32.partialorder %v702, inf
        %v766 = vsel %vm765, %v702, %v764
        %vm767 = vcmp.eq.f32.partialorder %v702, 0.0
        %v768 = vand.u32 %v702, 2147483648
        %v769 = vsel %vm767, %v768, %v766
        %v770 = vrsqrt.pop %v704
        %v771 = vmul.f32 %v704, %v770
        %vm772 = vcmp.eq.f32.partialorder %v704, inf
        %v773 = vsel %vm772, %v704, %v771
        %vm774 = vcmp.eq.f32.partialorder %v704, 0.0
        %v775 = vand.u32 %v704, 2147483648
        %v776 = vsel %vm774, %v775, %v773
        %v777 = vrsqrt.pop %v706
        %v778 = vmul.f32 %v706, %v777
        %vm779 = vcmp.eq.f32.partialorder %v706, inf
        %v780 = vsel %vm779, %v706, %v778
        %vm781 = vcmp.eq.f32.partialorder %v706, 0.0
        %v782 = vand.u32 %v706, 2147483648
        %v783 = vsel %vm781, %v782, %v780
        %v784 = vrsqrt.pop %v708
        %v785 = vmul.f32 %v708, %v784
        %vm786 = vcmp.eq.f32.partialorder %v708, inf
        %v787 = vsel %vm786, %v708, %v785
        %vm788 = vcmp.eq.f32.partialorder %v708, 0.0
        %v789 = vand.u32 %v708, 2147483648
        %v790 = vsel %vm788, %v789, %v787
        %v791 = vrsqrt.pop %v710
        %v792 = vmul.f32 %v710, %v791
        %vm793 = vcmp.eq.f32.partialorder %v710, inf
        %v794 = vsel %vm793, %v710, %v792
        %vm795 = vcmp.eq.f32.partialorder %v710, 0.0
        %v796 = vand.u32 %v710, 2147483648
        %v797 = vsel %vm795, %v796, %v794
        %v798 = vrsqrt.pop %v712
        %v799 = vmul.f32 %v712, %v798
        %vm800 = vcmp.eq.f32.partialorder %v712, inf
        %v801 = vsel %vm800, %v712, %v799
        %vm802 = vcmp.eq.f32.partialorder %v712, 0.0
        %v803 = vand.u32 %v712, 2147483648
        %v804 = vsel %vm802, %v803, %v801
        %v805 = vrsqrt.pop %v714
        %v806 = vmul.f32 %v714, %v805
        %vm807 = vcmp.eq.f32.partialorder %v714, inf
        %v808 = vsel %vm807, %v714, %v806
        %vm809 = vcmp.eq.f32.partialorder %v714, 0.0
        %v810 = vand.u32 %v714, 2147483648
        %v811 = vsel %vm809, %v810, %v808
        %v812 = vrsqrt.pop %v716
        %v813 = vmul.f32 %v716, %v812
        %vm814 = vcmp.eq.f32.partialorder %v716, inf
        %v815 = vsel %vm814, %v716, %v813
        %vm816 = vcmp.eq.f32.partialorder %v716, 0.0
        %v817 = vand.u32 %v716, 2147483648
        %v818 = vsel %vm816, %v817, %v815
        %v819 = vrsqrt.pop %v718
        %v820 = vmul.f32 %v718, %v819
        %vm821 = vcmp.eq.f32.partialorder %v718, inf
        %v822 = vsel %vm821, %v718, %v820
        %vm823 = vcmp.eq.f32.partialorder %v718, 0.0
        %v824 = vand.u32 %v718, 2147483648
        %v825 = vsel %vm823, %v824, %v822
        %v826 = vrsqrt.pop %v720
        %v827 = vmul.f32 %v720, %v826
        %vm828 = vcmp.eq.f32.partialorder %v720, inf
        %v829 = vsel %vm828, %v720, %v827
        %vm830 = vcmp.eq.f32.partialorder %v720, 0.0
        %v831 = vand.u32 %v720, 2147483648
        %v832 = vsel %vm830, %v831, %v829
        %v833 = vadd.f32 %v727, 1e-07
        %v834 = vadd.f32 %v734, 1e-07
        %v835 = vadd.f32 %v741, 1e-07
        %v836 = vadd.f32 %v748, 1e-07
        %v837 = vadd.f32 %v755, 1e-07
        %v838 = vadd.f32 %v762, 1e-07
        %v839 = vadd.f32 %v769, 1e-07
        %v840 = vadd.f32 %v776, 1e-07
        %v841 = vadd.f32 %v783, 1e-07
        %v842 = vadd.f32 %v790, 1e-07
        %v843 = vadd.f32 %v797, 1e-07
        %v844 = vadd.f32 %v804, 1e-07
        %v845 = vadd.f32 %v811, 1e-07
        %v846 = vadd.f32 %v818, 1e-07
        %v847 = vadd.f32 %v825, 1e-07
        %v848 = vadd.f32 %v832, 1e-07
        %v849 = vrcp.pop %v833
        %v850 = vrcp.pop %v834
        %v851 = vrcp.pop %v835
        %v852 = vrcp.pop %v836
        %v853 = vrcp.pop %v837
        %v854 = vrcp.pop %v838
        %v855 = vrcp.pop %v839
        %v856 = vrcp.pop %v840
        %v857 = vrcp.pop %v841
        %v858 = vrcp.pop %v842
        %v859 = vrcp.pop %v843
        %v860 = vrcp.pop %v844
        %v861 = vrcp.pop %v845
        %v862 = vrcp.pop %v846
        %v863 = vrcp.pop %v847
        %v864 = vrcp.pop %v848
        %v865 = vmul.f32 %v611, %v849
        %v866 = vmul.f32 %v614, %v850
        %v867 = vmul.f32 %v619, %v851
        %v868 = vmul.f32 %v622, %v852
        %v869 = vmul.f32 %v627, %v853
        %v870 = vmul.f32 %v630, %v854
        %v871 = vmul.f32 %v635, %v855
        %v872 = vmul.f32 %v638, %v856
        %v873 = vmul.f32 %v643, %v857
        %v874 = vmul.f32 %v646, %v858
        %v875 = vmul.f32 %v651, %v859
        %v876 = vmul.f32 %v654, %v860
        %v877 = vmul.f32 %v659, %v861
        %v878 = vmul.f32 %v662, %v862
        %v879 = vmul.f32 %v667, %v863
        %v880 = vmul.f32 %v670, %v864
        %881 = vst [vmem:[%s359] sm:$0xff] %v865
        %882 = vst [vmem:[%s359 + $0x8] sm:$0xff] %v866
        %883 = vst [vmem:[%s359 + $0x10] sm:$0xff] %v867
        %884 = vst [vmem:[%s359 + $0x18] sm:$0xff] %v868
        %885 = vst [vmem:[%s359 + $0x20] sm:$0xff] %v869
        %886 = vst [vmem:[%s359 + $0x28] sm:$0xff] %v870
        %887 = vst [vmem:[%s359 + $0x30] sm:$0xff] %v871
        %888 = vst [vmem:[%s359 + $0x38] sm:$0xff] %v872
        %889 = vst [vmem:[%s359 + $0x40] sm:$0xff] %v873
        %890 = vst [vmem:[%s359 + $0x48] sm:$0xff] %v874
        %891 = vst [vmem:[%s359 + $0x50] sm:$0xff] %v875
        %892 = vst [vmem:[%s359 + $0x58] sm:$0xff] %v876
        %893 = vst [vmem:[%s359 + $0x60] sm:$0xff] %v877
        %894 = vst [vmem:[%s359 + $0x68] sm:$0xff] %v878
        %895 = vst [vmem:[%s359 + $0x70] sm:$0xff] %v879
        %896 = vst [vmem:[%s359 + $0x78] sm:$0xff] %v880
        %s897 = sand.u32 %s179, 1
        %s898 = scalar_lea.sflag [#allocation4], %s897
        %s899 = sand.u32 %s179, 1
        %s900 = smul.addr %s899, 128
        %s901 = scalar_lea.vmem [#allocation8], %s900
        // Predicated region
        $region53: #{tpu_custom_call.1} parent=39 // pred_check
          %p902 = pneg %p189
        $region54: #{tpu_custom_call.1} parent=39 // pred_check_branch
          %904 = sbr.rel (%p902) target = $region56
        $region55: #{tpu_custom_call.1} parent=39 // pred_region
          %s905 = smul.u32 16, %s30
          %s907 = ssub.s32 2048, 2048
          %908 = vsyncadd %s898, %s907
          %s909 = smul.addr %s29, 16
          %s910 = sadd.s32 %s905, %s909
          %s911 = smul.addr %s910, 128
          %s912 = scalar_lea.hbm %s5, %s911
          %s913 = sshll.u32 %s901, 4
          %s914 = int_to_ptr.vmem [resolvable:$true] %s913
          %919 = dma.vmem_to_hbm [thread:$0]  %s914, 2048, %s912, %s898, 128, 128, 8
        $region56: #{tpu_custom_call.1} parent=39 // pred_fallthru
          _
      $region40: #{tpu_custom_call.1} parent=5 // pred_fallthru
        _
      %p920 = scmp.le.s32.totalorder 2, %s20
      // Predicated region
      $region57: #{tpu_custom_call.1} parent=5 // pred_check
        %p921 = pneg %p920
      $region58: #{tpu_custom_call.1} parent=5 // pred_check_branch
        %923 = sbr.rel (%p921) target = $region60
      $region59: #{tpu_custom_call.1} parent=5 // pred_region
        %s924 = ssub.s32 %s20, 2
        // Predicated region
        $region61: #{tpu_custom_call.1} parent=59 // pred_check
          %p925 = pneg %p195
        $region62: #{tpu_custom_call.1} parent=59 // pred_check_branch
          %927 = sbr.rel (%p925) target = $region64
        $region63: #{tpu_custom_call.1} parent=59 // pred_region
          %s928 = sand.u32 %s180, 1
          %s929 = scalar_lea.sflag [#allocation4], %s928
          %s930 = sand.u32 %s180, 1
          %s931 = smul.addr %s930, 128
          %s932 = scalar_lea.vmem [#allocation8], %s931
          %933 = dma.done %s929, 2048
        $region64: #{tpu_custom_call.1} parent=59 // pred_fallthru
          _
      $region60: #{tpu_custom_call.1} parent=5 // pred_fallthru
        _
    $region6: #{tpu_custom_call.1} parent=1 // loop_footer
      %s24 = sadd.s32 1, %s20
    $region7: #{tpu_custom_call.1} parent=1 // loop_footer_branch
      %19 = sbr.rel target = $region3
    $region8: #{tpu_custom_call.1} parent=1 // loop_exit
      _
    %934 = vsyncpa [#allocation3], 1
    %s935 = scalar_lea.sflag [#allocation3], 1
    %936 = vsyncpa %s935, 1
    %937 = vsyncpa [#allocation6], 1
    %s938 = scalar_lea.sflag [#allocation6], 1
    %939 = vsyncpa %s938, 1
    %940 = vsyncpa [#allocation4], 1
    %s941 = scalar_lea.sflag [#allocation4], 1
    %942 = vsyncpa %s941, 1

</llo_original>
